<compile_context>
chip_gen: v5e
topology: v5e:2x2
jax: 0.10.0
libtpu: 0.0.40
codegen_flags: <defaults>
</compile_context>

<pallas_src>
import jax
import jax.numpy as jnp
from jax.experimental import pallas as pl
from jax.experimental.pallas import tpu as pltpu

OBS_DIM = 5
ACT_DIM = 1
HIDDEN_DIM = 512


def _critic_kernel(obs_ref, act_ref, w1o_ref, w1a_ref, b1_ref,
                   w2_ref, b2_ref, w3t_ref, b3_ref, o_ref):
    """Fused 3-layer MLP over one batch tile; weights stay VMEM-resident."""
    obs = obs_ref[...]                       # (tb, obs_dim) f32
    act = act_ref[...]                       # (tb, act_dim) f32
    w1o = w1o_ref[...]                       # (obs_dim, H)  f32
    w1a = w1a_ref[...]                       # (act_dim, H)  f32

    # fc1: torch's concat([obs, act]) @ W1 + b1, computed as K = obs_dim +
    # act_dim exact-f32 broadcast multiply-adds on the VPU.  K is tiny (6), so
    # an MXU matmul would waste >95% of the K-depth and serialize MXU pushes
    # ahead of the dominant fc2 matmul.
    h1 = b1_ref[...]                         # (1, H) broadcasts against (tb, H)
    for k in range(obs.shape[-1]):
        h1 = h1 + obs[:, k:k + 1] * w1o[k:k + 1, :]
    for k in range(act.shape[-1]):
        h1 = h1 + act[:, k:k + 1] * w1a[k:k + 1, :]
    h1 = jnp.maximum(h1, 0.0)

    # fc2: bf16 weights (halves the dominant HBM load), f32 accumulation on MXU.
    h2 = jnp.dot(h1.astype(jnp.bfloat16), w2_ref[...],
                 preferred_element_type=jnp.float32) + b2_ref[...]
    h2 = jnp.maximum(h2, 0.0)

    # q_out: W3 stored transposed as (1, H) -> VPU multiply + lane reduction
    # instead of an N=1 MXU matmul with a lane-padded (H, 1) operand.
    q_col = jnp.sum(h2 * w3t_ref[...], axis=-1, keepdims=True) + b3_ref[...]
    # Lane-dense store: relayout the (tb, 1) column into a (1, 1, tb) row so
    # the writeback is a full-lane store rather than 1-lane masked stores.
    o_ref[...] = jnp.reshape(q_col, (1, 1, q_col.shape[0])).astype(o_ref.dtype)


def _const_spec(shape):
    """Weight spec: constant index_map (VMEM-resident), single-buffered."""
    # The weights are never refilled across grid steps; request a single
    # buffer so the default double-buffer shadow copies are not allocated.
    # Fall back gracefully if this JAX build lacks pipeline_mode on BlockSpec.
    if hasattr(pl, "Buffered"):
        try:
            return pl.BlockSpec(shape, lambda i: (0, 0),
                                pipeline_mode=pl.Buffered(1))
        except TypeError:
            pass
    return pl.BlockSpec(shape, lambda i: (0, 0))


def critic_forward(obs, act, params, *, block_b=None):
    """JAX wrapper: batch-tiled Pallas call; weights resident across grid steps."""
    w1o, w1a, b1, w2, b2, w3t, b3 = params
    B, obs_dim = obs.shape
    act_dim = act.shape[1]
    H = w2.shape[0]

    # Batch tile: large enough to amortize the ~0.35 us fixed per-grid-step
    # overhead over useful MXU work.  Default 512; bump to 1024 at large B.
    if block_b is None:
        block_b = 1024 if B >= 2048 else 512
    tb = max(8, min(block_b, B))
    tb = ((tb + 7) // 8) * 8                 # sublane-aligned
    num_tiles = int(pl.cdiv(B, tb))
    Bp = num_tiles * tb
    if Bp != B:
        pad = Bp - B
        # Padded rows flow through the MLP and are sliced off below.
        obs = jnp.pad(obs, ((0, pad), (0, 0)))
        act = jnp.pad(act, ((0, pad), (0, 0)))

    # Generation-aware VMEM cap: ~8 MiB covers tb<=256, 16 MiB tb<=512,
    # 24 MiB tb=1024 (obs/act lane-pad to (tb,128) f32 tiles, h1/h2 f32
    # temporaries are tb*H*4 B each); stays under v7x's 32 MiB scoped default.
    if tb <= 256:
        vmem_limit = 8 << 20
    elif tb <= 512:
        vmem_limit = 16 << 20
    else:
        vmem_limit = 24 << 20

    batch_spec = lambda d: pl.BlockSpec((tb, d), lambda i: (i, 0))

    # TODO(synk): if the upstream data producer can emit obs/act as a single
    # contiguous (B, 8)-padded array, feed that instead of two narrow inputs
    # (halves the small sublane-strided DMAs).  A wrapper-side concat would
    # only re-add an HBM round trip, so it is intentionally not done here.
    q = pl.pallas_call(
        _critic_kernel,
        out_shape=jax.ShapeDtypeStruct((num_tiles, 1, tb), jnp.float32),
        grid=(num_tiles,),
        in_specs=[
            batch_spec(obs_dim),            # obs  (B, obs_dim)
            batch_spec(act_dim),            # act  (B, act_dim)
            _const_spec((obs_dim, H)),      # W1_obs
            _const_spec((act_dim, H)),      # W1_act
            _const_spec((1, H)),            # b1
            _const_spec((H, H)),            # W2 (bf16)
            _const_spec((1, H)),            # b2
            _const_spec((1, H)),            # W3^T
            _const_spec((1, 1)),            # b3
        ],
        out_specs=pl.BlockSpec((1, 1, tb), lambda i: (i, 0, 0)),  # lane-dense
        compiler_params=pltpu.CompilerParams(
            # With num_tiles > 1 the batch axis can be split across cores; at
            # tiny batches (single grid step) the real lever is fusing more
            # work per call (e.g. twin Q1/Q2 critics), not this annotation.
            dimension_semantics=("parallel",),
            vmem_limit_bytes=vmem_limit,
        ),
    )(obs, act, w1o, w1a, b1, w2, b2, w3t, b3)
    return q.reshape(Bp, 1)[:B]


def init_params(key, obs_dim=OBS_DIM, act_dim=ACT_DIM, hidden_dim=HIDDEN_DIM):
    """Deterministic init mimicking nn.Linear's U(-1/sqrt(fan_in), 1/sqrt(fan_in)).

    Weight layout is (in_features, out_features) (i.e. torch W^T), W1 pre-split
    into obs/act slabs, W2 stored in bf16, W3 stored transposed as (1, H).
    """
    din = obs_dim + act_dim
    k1, k2, k3, k4, k5, k6 = jax.random.split(key, 6)

    def u(k, shape, fan_in):
        bound = 1.0 / jnp.sqrt(jnp.asarray(fan_in, jnp.float32))
        return jax.random.uniform(k, shape, jnp.float32, -bound, bound)

    w1 = u(k1, (din, hidden_dim), din)
    w1o, w1a = w1[:obs_dim], w1[obs_dim:]                     # split once at init
    b1 = u(k2, (1, hidden_dim), din)
    w2 = u(k3, (hidden_dim, hidden_dim), hidden_dim).astype(jnp.bfloat16)
    b2 = u(k4, (1, hidden_dim), hidden_dim)
    w3t = u(k5, (1, hidden_dim), hidden_dim)                  # W3^T, (1, H)
    b3 = u(k6, (1, 1), hidden_dim)
    return (w1o, w1a, b1, w2, b2, w3t, b3)


def _reference_forward(obs, act, params):
    """Pure-JAX reference mirroring the kernel's numerics (bf16 W2 / fc2 input)."""
    w1o, w1a, b1, w2, b2, w3t, b3 = params
    hi = jax.lax.Precision.HIGHEST
    h1 = jnp.maximum(jnp.dot(obs, w1o, precision=hi)
                     + jnp.dot(act, w1a, precision=hi) + b1, 0.0)
    h1 = h1.astype(jnp.bfloat16).astype(jnp.float32)
    h2 = jnp.maximum(jnp.dot(h1, w2.astype(jnp.float32), precision=hi) + b2, 0.0)
    return jnp.sum(h2 * w3t, axis=-1, keepdims=True) + b3


if __name__ == "__main__":
    key = jax.random.PRNGKey(0)
    kp, ko, ka = jax.random.split(key, 3)

    batch = 8
    params = init_params(kp)
    obs = jax.random.normal(ko, (batch, OBS_DIM), jnp.float32)
    act = jax.random.normal(ka, (batch, ACT_DIM), jnp.float32)

    q = critic_forward(obs, act, params)
    q = jax.block_until_ready(q)
    q_ref = _reference_forward(obs, act, params)
    assert q.shape == (batch, 1), q.shape
    assert jnp.allclose(q, q_ref, atol=2e-3, rtol=2e-3), "mismatch vs reference"

    # Exercise the multi-tile + batch-padding path once at a small size.
    batch2 = 40
    ko2, ka2 = jax.random.split(jax.random.PRNGKey(1))
    obs2 = jax.random.normal(ko2, (batch2, OBS_DIM), jnp.float32)
    act2 = jax.random.normal(ka2, (batch2, ACT_DIM), jnp.float32)
    q2 = jax.block_until_ready(critic_forward(obs2, act2, params, block_b=16))
    q2_ref = _reference_forward(obs2, act2, params)
    assert q2.shape == (batch2, 1), q2.shape
    assert jnp.allclose(q2, q2_ref, atol=2e-3, rtol=2e-3), "tiled mismatch"

    print("KERNEL_OK")
</pallas_src>

<mosaic_0001>
module attributes {stable_mosaic.version = 11 : i64} {
  func.func @_critic_kernel(%arg0: i32, %arg1: memref<8x5xf32, #tpu.memory_space<vmem>>, %arg2: memref<8x1xf32, #tpu.memory_space<vmem>>, %arg3: memref<5x512xf32, #tpu.memory_space<vmem>>, %arg4: memref<1x512xf32, #tpu.memory_space<vmem>>, %arg5: memref<1x512xf32, #tpu.memory_space<vmem>>, %arg6: memref<512x512xbf16, #tpu.memory_space<vmem>>, %arg7: memref<1x512xf32, #tpu.memory_space<vmem>>, %arg8: memref<1x512xf32, #tpu.memory_space<vmem>>, %arg9: memref<1x1xf32, #tpu.memory_space<vmem>>, %arg10: memref<1x1x8xf32, #tpu.memory_space<vmem>>) attributes {dimension_semantics = [#tpu.dimension_semantics<parallel>], iteration_bounds = array<i64: 1>, scalar_prefetch = 0 : i64, scratch_operands = 0 : i64, tpu.core_type = #tpu.core_type<tc>, window_params = [{transform_indices = @transform_0, window_bounds = array<i64: 8, 5>}, {transform_indices = @transform_1, window_bounds = array<i64: 8, 1>}, {pipeline_mode = #tpu.pipeline_mode<synchronous>, transform_indices = @transform_2, window_bounds = array<i64: 5, 512>}, {pipeline_mode = #tpu.pipeline_mode<synchronous>, transform_indices = @transform_3, window_bounds = array<i64: 1, 512>}, {pipeline_mode = #tpu.pipeline_mode<synchronous>, transform_indices = @transform_4, window_bounds = array<i64: 1, 512>}, {pipeline_mode = #tpu.pipeline_mode<synchronous>, transform_indices = @transform_5, window_bounds = array<i64: 512, 512>}, {pipeline_mode = #tpu.pipeline_mode<synchronous>, transform_indices = @transform_6, window_bounds = array<i64: 1, 512>}, {pipeline_mode = #tpu.pipeline_mode<synchronous>, transform_indices = @transform_7, window_bounds = array<i64: 1, 512>}, {pipeline_mode = #tpu.pipeline_mode<synchronous>, transform_indices = @transform_8, window_bounds = array<i64: 1, 1>}, {transform_indices = @transform_9, window_bounds = array<i64: 1, 1, 8>}]} {
    %c0 = arith.constant 0 : index
    %c0_0 = arith.constant 0 : index
    %0 = vector.load %arg1[%c0, %c0_0] : memref<8x5xf32, #tpu.memory_space<vmem>>, vector<8x5xf32>
    %c0_1 = arith.constant 0 : index
    %c0_2 = arith.constant 0 : index
    %1 = vector.load %arg2[%c0_1, %c0_2] : memref<8x1xf32, #tpu.memory_space<vmem>>, vector<8x1xf32>
    %c0_3 = arith.constant 0 : index
    %c0_4 = arith.constant 0 : index
    %2 = vector.load %arg3[%c0_3, %c0_4] : memref<5x512xf32, #tpu.memory_space<vmem>>, vector<5x512xf32>
    %c0_5 = arith.constant 0 : index
    %c0_6 = arith.constant 0 : index
    %3 = vector.load %arg4[%c0_5, %c0_6] : memref<1x512xf32, #tpu.memory_space<vmem>>, vector<1x512xf32>
    %c0_7 = arith.constant 0 : index
    %c0_8 = arith.constant 0 : index
    %4 = vector.load %arg5[%c0_7, %c0_8] : memref<1x512xf32, #tpu.memory_space<vmem>>, vector<1x512xf32>
    %5 = vector.extract_strided_slice %0 {offsets = [0, 0], sizes = [8, 1], strides = [1, 1]} : vector<8x5xf32> to vector<8x1xf32>
    %6 = vector.extract_strided_slice %2 {offsets = [0, 0], sizes = [1, 512], strides = [1, 1]} : vector<5x512xf32> to vector<1x512xf32>
    %7 = vector.broadcast %5 : vector<8x1xf32> to vector<8x512xf32>
    %8 = vector.broadcast %6 : vector<1x512xf32> to vector<8x512xf32>
    %9 = arith.mulf %7, %8 : vector<8x512xf32>
    %10 = vector.broadcast %4 : vector<1x512xf32> to vector<8x512xf32>
    %11 = arith.addf %10, %9 : vector<8x512xf32>
    %12 = vector.extract_strided_slice %0 {offsets = [0, 1], sizes = [8, 1], strides = [1, 1]} : vector<8x5xf32> to vector<8x1xf32>
    %13 = vector.extract_strided_slice %2 {offsets = [1, 0], sizes = [1, 512], strides = [1, 1]} : vector<5x512xf32> to vector<1x512xf32>
    %14 = vector.broadcast %12 : vector<8x1xf32> to vector<8x512xf32>
    %15 = vector.broadcast %13 : vector<1x512xf32> to vector<8x512xf32>
    %16 = arith.mulf %14, %15 : vector<8x512xf32>
    %17 = arith.addf %11, %16 : vector<8x512xf32>
    %18 = vector.extract_strided_slice %0 {offsets = [0, 2], sizes = [8, 1], strides = [1, 1]} : vector<8x5xf32> to vector<8x1xf32>
    %19 = vector.extract_strided_slice %2 {offsets = [2, 0], sizes = [1, 512], strides = [1, 1]} : vector<5x512xf32> to vector<1x512xf32>
    %20 = vector.broadcast %18 : vector<8x1xf32> to vector<8x512xf32>
    %21 = vector.broadcast %19 : vector<1x512xf32> to vector<8x512xf32>
    %22 = arith.mulf %20, %21 : vector<8x512xf32>
    %23 = arith.addf %17, %22 : vector<8x512xf32>
    %24 = vector.extract_strided_slice %0 {offsets = [0, 3], sizes = [8, 1], strides = [1, 1]} : vector<8x5xf32> to vector<8x1xf32>
    %25 = vector.extract_strided_slice %2 {offsets = [3, 0], sizes = [1, 512], strides = [1, 1]} : vector<5x512xf32> to vector<1x512xf32>
    %26 = vector.broadcast %24 : vector<8x1xf32> to vector<8x512xf32>
    %27 = vector.broadcast %25 : vector<1x512xf32> to vector<8x512xf32>
    %28 = arith.mulf %26, %27 : vector<8x512xf32>
    %29 = arith.addf %23, %28 : vector<8x512xf32>
    %30 = vector.extract_strided_slice %0 {offsets = [0, 4], sizes = [8, 1], strides = [1, 1]} : vector<8x5xf32> to vector<8x1xf32>
    %31 = vector.extract_strided_slice %2 {offsets = [4, 0], sizes = [1, 512], strides = [1, 1]} : vector<5x512xf32> to vector<1x512xf32>
    %32 = vector.broadcast %30 : vector<8x1xf32> to vector<8x512xf32>
    %33 = vector.broadcast %31 : vector<1x512xf32> to vector<8x512xf32>
    %34 = arith.mulf %32, %33 : vector<8x512xf32>
    %35 = arith.addf %29, %34 : vector<8x512xf32>
    %36 = vector.broadcast %1 : vector<8x1xf32> to vector<8x512xf32>
    %37 = vector.broadcast %3 : vector<1x512xf32> to vector<8x512xf32>
    %38 = arith.mulf %36, %37 : vector<8x512xf32>
    %39 = arith.addf %35, %38 : vector<8x512xf32>
    %cst = arith.constant 0.000000e+00 : f32
    %40 = vector.broadcast %cst : f32 to vector<8x512xf32>
    %41 = arith.maximumf %39, %40 : vector<8x512xf32>
    %42 = arith.truncf %41 : vector<8x512xf32> to vector<8x512xbf16>
    %c0_9 = arith.constant 0 : index
    %c0_10 = arith.constant 0 : index
    %43 = vector.load %arg6[%c0_9, %c0_10] : memref<512x512xbf16, #tpu.memory_space<vmem>>, vector<512x512xbf16>
    %cst_11 = arith.constant dense<0.000000e+00> : vector<8x512xf32>
    %44 = tpu.matmul %42, %43, %cst_11 {dimension_numbers = #tpu.dot_dimension_numbers<[1], [0], [0], [1], [0, 0, 1, 1], [], []>} : vector<8x512xbf16>, vector<512x512xbf16>, vector<8x512xf32> -> vector<8x512xf32>
    %c0_12 = arith.constant 0 : index
    %c0_13 = arith.constant 0 : index
    %45 = vector.load %arg7[%c0_12, %c0_13] : memref<1x512xf32, #tpu.memory_space<vmem>>, vector<1x512xf32>
    %46 = vector.broadcast %45 : vector<1x512xf32> to vector<8x512xf32>
    %47 = arith.addf %44, %46 : vector<8x512xf32>
    %cst_14 = arith.constant 0.000000e+00 : f32
    %48 = vector.broadcast %cst_14 : f32 to vector<8x512xf32>
    %49 = arith.maximumf %47, %48 : vector<8x512xf32>
    %c0_15 = arith.constant 0 : index
    %c0_16 = arith.constant 0 : index
    %50 = vector.load %arg8[%c0_15, %c0_16] : memref<1x512xf32, #tpu.memory_space<vmem>>, vector<1x512xf32>
    %51 = vector.broadcast %50 : vector<1x512xf32> to vector<8x512xf32>
    %52 = arith.mulf %49, %51 : vector<8x512xf32>
    %cst_17 = arith.constant dense<0.000000e+00> : vector<8xf32>
    %53 = vector.multi_reduction <add>, %52, %cst_17 [1] : vector<8x512xf32> to vector<8xf32>
    %54 = vector.shape_cast %53 : vector<8xf32> to vector<8x1xf32>
    %c0_18 = arith.constant 0 : index
    %c0_19 = arith.constant 0 : index
    %55 = vector.load %arg9[%c0_18, %c0_19] : memref<1x1xf32, #tpu.memory_space<vmem>>, vector<1x1xf32>
    %56 = vector.broadcast %55 : vector<1x1xf32> to vector<8x1xf32>
    %57 = arith.addf %54, %56 : vector<8x1xf32>
    %58 = vector.shape_cast %57 : vector<8x1xf32> to vector<1x1x8xf32>
    %c0_20 = arith.constant 0 : index
    %c0_21 = arith.constant 0 : index
    %c0_22 = arith.constant 0 : index
    %59 = vector.load %arg10[%c0_20, %c0_21, %c0_22] : memref<1x1x8xf32, #tpu.memory_space<vmem>>, vector<1x1x8xf32>
    tpu.vector_store %arg10[%c0_20, %c0_21, %c0_22], %58 {strides = array<i32>} : memref<1x1x8xf32, #tpu.memory_space<vmem>>, vector<1x1x8xf32>,
    return
  }
  func.func @transform_0(%arg0: i32) -> (i32, i32) {
    %c0_i32 = arith.constant 0 : i32
    %c0_i32_0 = arith.constant 0 : i32
    return %arg0, %c0_i32 : i32, i32
  }
  func.func @transform_1(%arg0: i32) -> (i32, i32) {
    %c0_i32 = arith.constant 0 : i32
    %c0_i32_0 = arith.constant 0 : i32
    return %arg0, %c0_i32 : i32, i32
  }
  func.func @transform_2(%arg0: i32) -> (i32, i32) {
    %c0_i32 = arith.constant 0 : i32
    %c0_i32_0 = arith.constant 0 : i32
    %c0_i32_1 = arith.constant 0 : i32
    return %c0_i32, %c0_i32_0 : i32, i32
  }
  func.func @transform_3(%arg0: i32) -> (i32, i32) {
    %c0_i32 = arith.constant 0 : i32
    %c0_i32_0 = arith.constant 0 : i32
    %c0_i32_1 = arith.constant 0 : i32
    return %c0_i32, %c0_i32_0 : i32, i32
  }
  func.func @transform_4(%arg0: i32) -> (i32, i32) {
    %c0_i32 = arith.constant 0 : i32
    %c0_i32_0 = arith.constant 0 : i32
    %c0_i32_1 = arith.constant 0 : i32
    return %c0_i32, %c0_i32_0 : i32, i32
  }
  func.func @transform_5(%arg0: i32) -> (i32, i32) {
    %c0_i32 = arith.constant 0 : i32
    %c0_i32_0 = arith.constant 0 : i32
    %c0_i32_1 = arith.constant 0 : i32
    return %c0_i32, %c0_i32_0 : i32, i32
  }
  func.func @transform_6(%arg0: i32) -> (i32, i32) {
    %c0_i32 = arith.constant 0 : i32
    %c0_i32_0 = arith.constant 0 : i32
    %c0_i32_1 = arith.constant 0 : i32
    return %c0_i32, %c0_i32_0 : i32, i32
  }
  func.func @transform_7(%arg0: i32) -> (i32, i32) {
    %c0_i32 = arith.constant 0 : i32
    %c0_i32_0 = arith.constant 0 : i32
    %c0_i32_1 = arith.constant 0 : i32
    return %c0_i32, %c0_i32_0 : i32, i32
  }
  func.func @transform_8(%arg0: i32) -> (i32, i32) {
    %c0_i32 = arith.constant 0 : i32
    %c0_i32_0 = arith.constant 0 : i32
    %c0_i32_1 = arith.constant 0 : i32
    return %c0_i32, %c0_i32_0 : i32, i32
  }
  func.func @transform_9(%arg0: i32) -> (i32, i32, i32) {
    %c0_i32 = arith.constant 0 : i32
    %c0_i32_0 = arith.constant 0 : i32
    %c0_i32_1 = arith.constant 0 : i32
    return %arg0, %c0_i32, %c0_i32_0 : i32, i32, i32
  }
}

</mosaic_0001>

<llo_original>
// kernel: tpu_custom_call.1
$region0: #{tpu_custom_call.1}
  #allocation0 [shape = 'u32[]', space=smem, size = 0x4, offset = 0x4, fixed_abs, tag = 'smem constant byte address 0x4 - core index']
  #allocation1 [shape = 'u32[72,128]{1,0:T(1,128)}', space=vmem, size = 0x9000, scoped, tag = 'internal scratch']
  #allocation2 [shape = 'f32[1,1]{1,0:T(1,128)S(1)}', space=vmem, size = 0x200, scoped, tag = 'scoped memory for tpu_custom_call.1']
  %s0 = inlined_call_operand.vmem [shape: f32[8,5], index: 0, kind: input, shape index: {}]
  %s1 = inlined_call_operand.vmem [shape: f32[8,1], index: 1, kind: input, shape index: {}]
  %s2 = inlined_call_operand.hbm [shape: f32[5,512], index: 2, kind: input, shape index: {}]
  %s3 = inlined_call_operand.hbm [shape: f32[1,512], index: 3, kind: input, shape index: {}]
  %s4 = inlined_call_operand.vmem [shape: f32[1,512], index: 4, kind: input, shape index: {}]
  %s5 = inlined_call_operand.hbm [shape: bf16[512,512], index: 5, kind: input, shape index: {}]
  %s6 = inlined_call_operand.hbm [shape: f32[1,512], index: 6, kind: input, shape index: {}]
  %s7 = inlined_call_operand.hbm [shape: f32[1,512], index: 7, kind: input, shape index: {}]
  %s8 = inlined_call_operand.<no memory space> [shape: f32[1,1], index: 8, kind: input, shape index: {}]
  %s9 = inlined_call_operand.hbm [shape: f32[1,1,8], index: 9, kind: output, shape index: {}]
  %s10 = sld [smem:[#allocation0]]
  $region66: #{tpu_custom_call.1} parent=0
    _
  %s12 = ssub.s32 1, %s10
  %s13 = scalar_select 0, %s12, %s10
  %v14 = vstv %s8
  %15 = vst [vmem:[#allocation2] sm:$0x1] %v14
  $region1: #{tpu_custom_call.1} parent=0
    #allocation3 [shape = 'u8[16384]{0}', space=vmem, size = 0x4000, scoped, tag = 'input window, operand 2, single buffered']
    #allocation4 [shape = 's32[1]{0}', space=sflag, size = 0x4, scoped, tag = 'scoped memory for tpu_custom_call.1']
    #allocation5 [shape = 's32[1]{0}', space=sflag, size = 0x4, scoped, tag = 'scoped memory for tpu_custom_call.1']
    #allocation6 [shape = 'u8[2048]{0}', space=vmem, size = 0x800, scoped, tag = 'input window, operand 3, single buffered']
    #allocation7 [shape = 's32[1]{0}', space=sflag, size = 0x4, scoped, tag = 'scoped memory for tpu_custom_call.1']
    #allocation8 [shape = 'u8[524288]{0}', space=vmem, size = 0x80000, scoped, tag = 'input window, operand 5, single buffered']
    #allocation9 [shape = 'u8[2048]{0}', space=vmem, size = 0x800, scoped, tag = 'input window, operand 6, single buffered']
    #allocation10 [shape = 's32[1]{0}', space=sflag, size = 0x4, scoped, tag = 'scoped memory for tpu_custom_call.1']
    #allocation11 [shape = 'u8[2048]{0}', space=vmem, size = 0x800, scoped, tag = 'input window, operand 7, single buffered']
    #allocation12 [shape = 'u8[512]{0}', space=vmem, size = 0x400, scoped, tag = 'output window, operand 0, single buffered']
    %16 = vsyncpa [#allocation4], 0
    %17 = vsyncpa [#allocation7], 0
    %18 = vsyncpa [#allocation10], 0
    %19 = vsyncpa [#allocation5], 0
    // Predicated region
    $region2: #{tpu_custom_call.1} parent=1 // pred_check
      _
    $region3: #{tpu_custom_call.1} parent=1 // pred_check_branch
      %21 = sbr.rel (0) target = $region5
    $region4: #{tpu_custom_call.1} parent=1 // pred_region
      _
    $region5: #{tpu_custom_call.1} parent=1 // pred_fallthru
      _
    // Predicated region
    $region6: #{tpu_custom_call.1} parent=1 // pred_check
      _
    $region7: #{tpu_custom_call.1} parent=1 // pred_check_branch
      %23 = sbr.rel (0) target = $region9
    $region8: #{tpu_custom_call.1} parent=1 // pred_region
      _
    $region9: #{tpu_custom_call.1} parent=1 // pred_fallthru
      _
    // Predicated region
    $region10: #{tpu_custom_call.1} parent=1 // pred_check
      _
    $region11: #{tpu_custom_call.1} parent=1 // pred_check_branch
      %25 = sbr.rel (0) target = $region13
    $region12: #{tpu_custom_call.1} parent=1 // pred_region
      %27 = vsyncadd [#allocation4], 0
      %s29 = sshll.u32 %s2, 4
      %s30 = int_to_ptr.hbm [resolvable:$true] %s29
      %s31 = sshll.u32 [#allocation3], 4
      %s32 = int_to_ptr.vmem [resolvable:$true] %s31
      %34 = dma.hbm_to_vmem [thread:$0]  %s30, 512, %s32, [#allocation4]
    $region13: #{tpu_custom_call.1} parent=1 // pred_fallthru
      _
    // Predicated region
    $region14: #{tpu_custom_call.1} parent=1 // pred_check
      _
    $region15: #{tpu_custom_call.1} parent=1 // pred_check_branch
      %36 = sbr.rel (0) target = $region17
    $region16: #{tpu_custom_call.1} parent=1 // pred_region
      %38 = vsyncadd [#allocation7], 0
      %s40 = sshll.u32 %s3, 4
      %s41 = int_to_ptr.hbm [resolvable:$true] %s40
      %s42 = sshll.u32 [#allocation6], 4
      %s43 = int_to_ptr.vmem [resolvable:$true] %s42
      %45 = dma.hbm_to_vmem [thread:$0]  %s41, 64, %s43, [#allocation7]
    $region17: #{tpu_custom_call.1} parent=1 // pred_fallthru
      _
    // Predicated region
    $region18: #{tpu_custom_call.1} parent=1 // pred_check
      _
    $region19: #{tpu_custom_call.1} parent=1 // pred_check_branch
      %47 = sbr.rel (0) target = $region21
    $region20: #{tpu_custom_call.1} parent=1 // pred_region
      _
    $region21: #{tpu_custom_call.1} parent=1 // pred_fallthru
      _
    // Predicated region
    $region22: #{tpu_custom_call.1} parent=1 // pred_check
      _
    $region23: #{tpu_custom_call.1} parent=1 // pred_check_branch
      %49 = sbr.rel (0) target = $region25
    $region24: #{tpu_custom_call.1} parent=1 // pred_region
      %51 = vsyncadd [#allocation7], 0
      %s52 = sshll.u32 %s5, 4
      %s53 = int_to_ptr.hbm [resolvable:$true] %s52
      %s54 = sshll.u32 [#allocation8], 4
      %s55 = int_to_ptr.vmem [resolvable:$true] %s54
      %60 = dma.hbm_to_vmem [thread:$0]  %s53, 16384, %s55, [#allocation7], 256, 256, 16
    $region25: #{tpu_custom_call.1} parent=1 // pred_fallthru
      _
    // Predicated region
    $region26: #{tpu_custom_call.1} parent=1 // pred_check
      _
    $region27: #{tpu_custom_call.1} parent=1 // pred_check_branch
      %62 = sbr.rel (0) target = $region29
    $region28: #{tpu_custom_call.1} parent=1 // pred_region
      %64 = vsyncadd [#allocation10], 0
      %s66 = sshll.u32 %s6, 4
      %s67 = int_to_ptr.hbm [resolvable:$true] %s66
      %s68 = sshll.u32 [#allocation9], 4
      %s69 = int_to_ptr.vmem [resolvable:$true] %s68
      %71 = dma.hbm_to_vmem [thread:$0]  %s67, 64, %s69, [#allocation10]
    $region29: #{tpu_custom_call.1} parent=1 // pred_fallthru
      _
    // Predicated region
    $region30: #{tpu_custom_call.1} parent=1 // pred_check
      _
    $region31: #{tpu_custom_call.1} parent=1 // pred_check_branch
      %73 = sbr.rel (0) target = $region33
    $region32: #{tpu_custom_call.1} parent=1 // pred_region
      %75 = vsyncadd [#allocation10], 0
      %s77 = sshll.u32 %s7, 4
      %s78 = int_to_ptr.hbm [resolvable:$true] %s77
      %s79 = sshll.u32 [#allocation11], 4
      %s80 = int_to_ptr.vmem [resolvable:$true] %s79
      %82 = dma.hbm_to_vmem [thread:$0]  %s78, 64, %s80, [#allocation10]
    $region33: #{tpu_custom_call.1} parent=1 // pred_fallthru
      _
    // Predicated region
    $region34: #{tpu_custom_call.1} parent=1 // pred_check
      _
    $region35: #{tpu_custom_call.1} parent=1 // pred_check_branch
      %84 = sbr.rel (0) target = $region37
    $region36: #{tpu_custom_call.1} parent=1 // pred_region
      _
    $region37: #{tpu_custom_call.1} parent=1 // pred_fallthru
      _
    // Predicated region
    $region38: #{tpu_custom_call.1} parent=1 // pred_check
      _
    $region39: #{tpu_custom_call.1} parent=1 // pred_check_branch
      %86 = sbr.rel (0) target = $region41
    $region40: #{tpu_custom_call.1} parent=1 // pred_region
      %88 = dma.done [#allocation4], 512
    $region41: #{tpu_custom_call.1} parent=1 // pred_fallthru
      _
    // Predicated region
    $region42: #{tpu_custom_call.1} parent=1 // pred_check
      _
    $region43: #{tpu_custom_call.1} parent=1 // pred_check_branch
      %90 = sbr.rel (0) target = $region45
    $region44: #{tpu_custom_call.1} parent=1 // pred_region
      %92 = dma.done [#allocation7], 64
    $region45: #{tpu_custom_call.1} parent=1 // pred_fallthru
      _
    // Predicated region
    $region46: #{tpu_custom_call.1} parent=1 // pred_check
      _
    $region47: #{tpu_custom_call.1} parent=1 // pred_check_branch
      %94 = sbr.rel (0) target = $region49
    $region48: #{tpu_custom_call.1} parent=1 // pred_region
      %96 = dma.done [#allocation7], 16384
    $region49: #{tpu_custom_call.1} parent=1 // pred_fallthru
      _
    // Predicated region
    $region50: #{tpu_custom_call.1} parent=1 // pred_check
      _
    $region51: #{tpu_custom_call.1} parent=1 // pred_check_branch
      %98 = sbr.rel (0) target = $region53
    $region52: #{tpu_custom_call.1} parent=1 // pred_region
      %100 = dma.done [#allocation10], 64
    $region53: #{tpu_custom_call.1} parent=1 // pred_fallthru
      _
    // Predicated region
    $region54: #{tpu_custom_call.1} parent=1 // pred_check
      _
    $region55: #{tpu_custom_call.1} parent=1 // pred_check_branch
      %102 = sbr.rel (0) target = $region57
    $region56: #{tpu_custom_call.1} parent=1 // pred_region
      %104 = dma.done [#allocation10], 64
    $region57: #{tpu_custom_call.1} parent=1 // pred_fallthru
      _
    %v105 = vld [vmem:[%s0] sm:$0xff]
    %v106 = vld [vmem:[%s1] sm:$0xff]
    %v107 = vld [vmem:[#allocation3] sm:$0x1f]
    %v108 = vld [vmem:[#allocation3 + $0x8] sm:$0x1f]
    %v109 = vld [vmem:[#allocation3 + $0x10] sm:$0x1f]
    %v110 = vld [vmem:[#allocation3 + $0x18] sm:$0x1f]
    %v111 = vld [vmem:[#allocation6] sm:$0xf]
    %v112 = vld [vmem:[%s4] sm:$0xf]
    %114 = vset.pattern.permute.xlu0 0
    %115 = vperm.xlu0 %114, %v105
    %v116 = vpop.permute.xlu0 %115
    %v118 = vperm.slane %v107, 0
    %v119 = vperm.slane %v108, 0
    %v120 = vperm.slane %v109, 0
    %v121 = vperm.slane %v110, 0
    %v122 = vmul.f32 %v116, %v118
    %v123 = vmul.f32 %v116, %v119
    %v124 = vmul.f32 %v116, %v120
    %v125 = vmul.f32 %v116, %v121
    %v127 = vperm.slane %v112, 0
    %v128 = vperm.slane %v112, 1
    %v129 = vperm.slane %v112, 2
    %v130 = vperm.slane %v112, 3
    %v135 = vadd.f32 %v127, %v122
    %v136 = vadd.f32 %v128, %v123
    %v137 = vadd.f32 %v129, %v124
    %v138 = vadd.f32 %v130, %v125
    %139 = vset.pattern.permute.xlu0 1
    %140 = vperm.xlu0 %139, %v105
    %v141 = vpop.permute.xlu0 %140
    %v143 = vperm.slane %v107, 1
    %v144 = vperm.slane %v108, 1
    %v145 = vperm.slane %v109, 1
    %v146 = vperm.slane %v110, 1
    %v147 = vmul.f32 %v141, %v143
    %v148 = vmul.f32 %v141, %v144
    %v149 = vmul.f32 %v141, %v145
    %v150 = vmul.f32 %v141, %v146
    %v151 = vadd.f32 %v135, %v147
    %v152 = vadd.f32 %v136, %v148
    %v153 = vadd.f32 %v137, %v149
    %v154 = vadd.f32 %v138, %v150
    %155 = vset.pattern.permute.xlu0 2
    %156 = vperm.xlu0 %155, %v105
    %v157 = vpop.permute.xlu0 %156
    %v159 = vperm.slane %v107, 2
    %v160 = vperm.slane %v108, 2
    %v161 = vperm.slane %v109, 2
    %v162 = vperm.slane %v110, 2
    %v163 = vmul.f32 %v157, %v159
    %v164 = vmul.f32 %v157, %v160
    %v165 = vmul.f32 %v157, %v161
    %v166 = vmul.f32 %v157, %v162
    %v167 = vadd.f32 %v151, %v163
    %v168 = vadd.f32 %v152, %v164
    %v169 = vadd.f32 %v153, %v165
    %v170 = vadd.f32 %v154, %v166
    %171 = vset.pattern.permute.xlu0 3
    %172 = vperm.xlu0 %171, %v105
    %v173 = vpop.permute.xlu0 %172
    %v175 = vperm.slane %v107, 3
    %v176 = vperm.slane %v108, 3
    %v177 = vperm.slane %v109, 3
    %v178 = vperm.slane %v110, 3
    %v179 = vmul.f32 %v173, %v175
    %v180 = vmul.f32 %v173, %v176
    %v181 = vmul.f32 %v173, %v177
    %v182 = vmul.f32 %v173, %v178
    %v183 = vadd.f32 %v167, %v179
    %v184 = vadd.f32 %v168, %v180
    %v185 = vadd.f32 %v169, %v181
    %v186 = vadd.f32 %v170, %v182
    %187 = vset.pattern.permute.xlu0 4
    %188 = vperm.xlu0 %187, %v105
    %v189 = vpop.permute.xlu0 %188
    %v191 = vperm.slane %v107, 4
    %v192 = vperm.slane %v108, 4
    %v193 = vperm.slane %v109, 4
    %v194 = vperm.slane %v110, 4
    %v195 = vmul.f32 %v189, %v191
    %v196 = vmul.f32 %v189, %v192
    %v197 = vmul.f32 %v189, %v193
    %v198 = vmul.f32 %v189, %v194
    %v199 = vadd.f32 %v183, %v195
    %v200 = vadd.f32 %v184, %v196
    %v201 = vadd.f32 %v185, %v197
    %v202 = vadd.f32 %v186, %v198
    %204 = vset.pattern.permute.xlu0 0
    %205 = vperm.xlu0 %204, %v106
    %v206 = vpop.permute.xlu0 %205
    %v209 = vperm.slane %v111, 0
    %v210 = vperm.slane %v111, 1
    %v211 = vperm.slane %v111, 2
    %v212 = vperm.slane %v111, 3
    %v217 = vmul.f32 %v206, %v209
    %v218 = vmul.f32 %v206, %v210
    %v219 = vmul.f32 %v206, %v211
    %v220 = vmul.f32 %v206, %v212
    %v221 = vadd.f32 %v199, %v217
    %v222 = vadd.f32 %v200, %v218
    %v223 = vadd.f32 %v201, %v219
    %v224 = vadd.f32 %v202, %v220
    %v225 = vmax.f32 %v221, 0.0
    %v226 = vmax.f32 %v222, 0.0
    %v227 = vmax.f32 %v223, 0.0
    %v228 = vmax.f32 %v224, 0.0
    %v229 = vpack.c.bf16 %v225, %v225
    %v230 = vpack.c.bf16 %v226, %v226
    %v231 = vpack.c.bf16 %v227, %v227
    %v232 = vpack.c.bf16 %v228, %v228
    %v233 = vld [vmem:[#allocation8] sm:$0xff]
    %v234 = vld [vmem:[#allocation8 + $0x8] sm:$0xff]
    %v235 = vld [vmem:[#allocation8 + $0x10] sm:$0xff]
    %v236 = vld [vmem:[#allocation8 + $0x18] sm:$0xff]
    %v237 = vld [vmem:[#allocation8 + $0x20] sm:$0xff]
    %v238 = vld [vmem:[#allocation8 + $0x28] sm:$0xff]
    %v239 = vld [vmem:[#allocation8 + $0x30] sm:$0xff]
    %v240 = vld [vmem:[#allocation8 + $0x38] sm:$0xff]
    %v241 = vld [vmem:[#allocation8 + $0x40] sm:$0xff]
    %v242 = vld [vmem:[#allocation8 + $0x48] sm:$0xff]
    %v243 = vld [vmem:[#allocation8 + $0x50] sm:$0xff]
    %v244 = vld [vmem:[#allocation8 + $0x58] sm:$0xff]
    %v245 = vld [vmem:[#allocation8 + $0x60] sm:$0xff]
    %v246 = vld [vmem:[#allocation8 + $0x68] sm:$0xff]
    %v247 = vld [vmem:[#allocation8 + $0x70] sm:$0xff]
    %v248 = vld [vmem:[#allocation8 + $0x78] sm:$0xff]
    %v249 = vld [vmem:[#allocation8 + $0x80] sm:$0xff]
    %v250 = vld [vmem:[#allocation8 + $0x88] sm:$0xff]
    %v251 = vld [vmem:[#allocation8 + $0x90] sm:$0xff]
    %v252 = vld [vmem:[#allocation8 + $0x98] sm:$0xff]
    %v253 = vld [vmem:[#allocation8 + $0xa0] sm:$0xff]
    %v254 = vld [vmem:[#allocation8 + $0xa8] sm:$0xff]
    %v255 = vld [vmem:[#allocation8 + $0xb0] sm:$0xff]
    %v256 = vld [vmem:[#allocation8 + $0xb8] sm:$0xff]
    %v257 = vld [vmem:[#allocation8 + $0xc0] sm:$0xff]
    %v258 = vld [vmem:[#allocation8 + $0xc8] sm:$0xff]
    %v259 = vld [vmem:[#allocation8 + $0xd0] sm:$0xff]
    %v260 = vld [vmem:[#allocation8 + $0xd8] sm:$0xff]
    %v261 = vld [vmem:[#allocation8 + $0xe0] sm:$0xff]
    %v262 = vld [vmem:[#allocation8 + $0xe8] sm:$0xff]
    %v263 = vld [vmem:[#allocation8 + $0xf0] sm:$0xff]
    %v264 = vld [vmem:[#allocation8 + $0xf8] sm:$0xff]
    %v265 = vld [vmem:[#allocation8 + $0x100] sm:$0xff]
    %v266 = vld [vmem:[#allocation8 + $0x108] sm:$0xff]
    %v267 = vld [vmem:[#allocation8 + $0x110] sm:$0xff]
    %v268 = vld [vmem:[#allocation8 + $0x118] sm:$0xff]
    %v269 = vld [vmem:[#allocation8 + $0x120] sm:$0xff]
    %v270 = vld [vmem:[#allocation8 + $0x128] sm:$0xff]
    %v271 = vld [vmem:[#allocation8 + $0x130] sm:$0xff]
    %v272 = vld [vmem:[#allocation8 + $0x138] sm:$0xff]
    %v273 = vld [vmem:[#allocation8 + $0x140] sm:$0xff]
    %v274 = vld [vmem:[#allocation8 + $0x148] sm:$0xff]
    %v275 = vld [vmem:[#allocation8 + $0x150] sm:$0xff]
    %v276 = vld [vmem:[#allocation8 + $0x158] sm:$0xff]
    %v277 = vld [vmem:[#allocation8 + $0x160] sm:$0xff]
    %v278 = vld [vmem:[#allocation8 + $0x168] sm:$0xff]
    %v279 = vld [vmem:[#allocation8 + $0x170] sm:$0xff]
    %v280 = vld [vmem:[#allocation8 + $0x178] sm:$0xff]
    %v281 = vld [vmem:[#allocation8 + $0x180] sm:$0xff]
    %v282 = vld [vmem:[#allocation8 + $0x188] sm:$0xff]
    %v283 = vld [vmem:[#allocation8 + $0x190] sm:$0xff]
    %v284 = vld [vmem:[#allocation8 + $0x198] sm:$0xff]
    %v285 = vld [vmem:[#allocation8 + $0x1a0] sm:$0xff]
    %v286 = vld [vmem:[#allocation8 + $0x1a8] sm:$0xff]
    %v287 = vld [vmem:[#allocation8 + $0x1b0] sm:$0xff]
    %v288 = vld [vmem:[#allocation8 + $0x1b8] sm:$0xff]
    %v289 = vld [vmem:[#allocation8 + $0x1c0] sm:$0xff]
    %v290 = vld [vmem:[#allocation8 + $0x1c8] sm:$0xff]
    %v291 = vld [vmem:[#allocation8 + $0x1d0] sm:$0xff]
    %v292 = vld [vmem:[#allocation8 + $0x1d8] sm:$0xff]
    %v293 = vld [vmem:[#allocation8 + $0x1e0] sm:$0xff]
    %v294 = vld [vmem:[#allocation8 + $0x1e8] sm:$0xff]
    %v295 = vld [vmem:[#allocation8 + $0x1f0] sm:$0xff]
    %v296 = vld [vmem:[#allocation8 + $0x1f8] sm:$0xff]
    %v297 = vld [vmem:[#allocation8 + $0x200] sm:$0xff]
    %v298 = vld [vmem:[#allocation8 + $0x208] sm:$0xff]
    %v299 = vld [vmem:[#allocation8 + $0x210] sm:$0xff]
    %v300 = vld [vmem:[#allocation8 + $0x218] sm:$0xff]
    %v301 = vld [vmem:[#allocation8 + $0x220] sm:$0xff]
    %v302 = vld [vmem:[#allocation8 + $0x228] sm:$0xff]
    %v303 = vld [vmem:[#allocation8 + $0x230] sm:$0xff]
    %v304 = vld [vmem:[#allocation8 + $0x238] sm:$0xff]
    %v305 = vld [vmem:[#allocation8 + $0x240] sm:$0xff]
    %v306 = vld [vmem:[#allocation8 + $0x248] sm:$0xff]
    %v307 = vld [vmem:[#allocation8 + $0x250] sm:$0xff]
    %v308 = vld [vmem:[#allocation8 + $0x258] sm:$0xff]
    %v309 = vld [vmem:[#allocation8 + $0x260] sm:$0xff]
    %v310 = vld [vmem:[#allocation8 + $0x268] sm:$0xff]
    %v311 = vld [vmem:[#allocation8 + $0x270] sm:$0xff]
    %v312 = vld [vmem:[#allocation8 + $0x278] sm:$0xff]
    %v313 = vld [vmem:[#allocation8 + $0x280] sm:$0xff]
    %v314 = vld [vmem:[#allocation8 + $0x288] sm:$0xff]
    %v315 = vld [vmem:[#allocation8 + $0x290] sm:$0xff]
    %v316 = vld [vmem:[#allocation8 + $0x298] sm:$0xff]
    %v317 = vld [vmem:[#allocation8 + $0x2a0] sm:$0xff]
    %v318 = vld [vmem:[#allocation8 + $0x2a8] sm:$0xff]
    %v319 = vld [vmem:[#allocation8 + $0x2b0] sm:$0xff]
    %v320 = vld [vmem:[#allocation8 + $0x2b8] sm:$0xff]
    %v321 = vld [vmem:[#allocation8 + $0x2c0] sm:$0xff]
    %v322 = vld [vmem:[#allocation8 + $0x2c8] sm:$0xff]
    %v323 = vld [vmem:[#allocation8 + $0x2d0] sm:$0xff]
    %v324 = vld [vmem:[#allocation8 + $0x2d8] sm:$0xff]
    %v325 = vld [vmem:[#allocation8 + $0x2e0] sm:$0xff]
    %v326 = vld [vmem:[#allocation8 + $0x2e8] sm:$0xff]
    %v327 = vld [vmem:[#allocation8 + $0x2f0] sm:$0xff]
    %v328 = vld [vmem:[#allocation8 + $0x2f8] sm:$0xff]
    %v329 = vld [vmem:[#allocation8 + $0x300] sm:$0xff]
    %v330 = vld [vmem:[#allocation8 + $0x308] sm:$0xff]
    %v331 = vld [vmem:[#allocation8 + $0x310] sm:$0xff]
    %v332 = vld [vmem:[#allocation8 + $0x318] sm:$0xff]
    %v333 = vld [vmem:[#allocation8 + $0x320] sm:$0xff]
    %v334 = vld [vmem:[#allocation8 + $0x328] sm:$0xff]
    %v335 = vld [vmem:[#allocation8 + $0x330] sm:$0xff]
    %v336 = vld [vmem:[#allocation8 + $0x338] sm:$0xff]
    %v337 = vld [vmem:[#allocation8 + $0x340] sm:$0xff]
    %v338 = vld [vmem:[#allocation8 + $0x348] sm:$0xff]
    %v339 = vld [vmem:[#allocation8 + $0x350] sm:$0xff]
    %v340 = vld [vmem:[#allocation8 + $0x358] sm:$0xff]
    %v341 = vld [vmem:[#allocation8 + $0x360] sm:$0xff]
    %v342 = vld [vmem:[#allocation8 + $0x368] sm:$0xff]
    %v343 = vld [vmem:[#allocation8 + $0x370] sm:$0xff]
    %v344 = vld [vmem:[#allocation8 + $0x378] sm:$0xff]
    %v345 = vld [vmem:[#allocation8 + $0x380] sm:$0xff]
    %v346 = vld [vmem:[#allocation8 + $0x388] sm:$0xff]
    %v347 = vld [vmem:[#allocation8 + $0x390] sm:$0xff]
    %v348 = vld [vmem:[#allocation8 + $0x398] sm:$0xff]
    %v349 = vld [vmem:[#allocation8 + $0x3a0] sm:$0xff]
    %v350 = vld [vmem:[#allocation8 + $0x3a8] sm:$0xff]
    %v351 = vld [vmem:[#allocation8 + $0x3b0] sm:$0xff]
    %v352 = vld [vmem:[#allocation8 + $0x3b8] sm:$0xff]
    %v353 = vld [vmem:[#allocation8 + $0x3c0] sm:$0xff]
    %v354 = vld [vmem:[#allocation8 + $0x3c8] sm:$0xff]
    %v355 = vld [vmem:[#allocation8 + $0x3d0] sm:$0xff]
    %v356 = vld [vmem:[#allocation8 + $0x3d8] sm:$0xff]
    %v357 = vld [vmem:[#allocation8 + $0x3e0] sm:$0xff]
    %v358 = vld [vmem:[#allocation8 + $0x3e8] sm:$0xff]
    %v359 = vld [vmem:[#allocation8 + $0x3f0] sm:$0xff]
    %v360 = vld [vmem:[#allocation8 + $0x3f8] sm:$0xff]
    %v361 = vld [vmem:[#allocation9] sm:$0xf]
    %v363 = vperm.slane %v361, 0
    %v364 = vperm.slane %v361, 1
    %v365 = vperm.slane %v361, 2
    %v366 = vperm.slane %v361, 3
    %v499 = vunpack.c.l.b16 %v233
    %v500 = vunpack.c.h.b16 %v233
    %v501 = vunpack.c.l.b16 %v234
    %v502 = vunpack.c.h.b16 %v234
    %v503 = vunpack.c.l.b16 %v235
    %v504 = vunpack.c.h.b16 %v235
    %v505 = vunpack.c.l.b16 %v236
    %v506 = vunpack.c.h.b16 %v236
    %v507 = vunpack.c.l.b16 %v237
    %v508 = vunpack.c.h.b16 %v237
    %v509 = vunpack.c.l.b16 %v238
    %v510 = vunpack.c.h.b16 %v238
    %v511 = vunpack.c.l.b16 %v239
    %v512 = vunpack.c.h.b16 %v239
    %v513 = vunpack.c.l.b16 %v240
    %v514 = vunpack.c.h.b16 %v240
    %v515 = vunpack.c.l.b16 %v241
    %v516 = vunpack.c.h.b16 %v241
    %v517 = vunpack.c.l.b16 %v242
    %v518 = vunpack.c.h.b16 %v242
    %v519 = vunpack.c.l.b16 %v243
    %v520 = vunpack.c.h.b16 %v243
    %v521 = vunpack.c.l.b16 %v244
    %v522 = vunpack.c.h.b16 %v244
    %v523 = vunpack.c.l.b16 %v245
    %v524 = vunpack.c.h.b16 %v245
    %v525 = vunpack.c.l.b16 %v246
    %v526 = vunpack.c.h.b16 %v246
    %v527 = vunpack.c.l.b16 %v247
    %v528 = vunpack.c.h.b16 %v247
    %v529 = vunpack.c.l.b16 %v248
    %v530 = vunpack.c.h.b16 %v248
    %v531 = vunpack.c.l.b16 %v249
    %v532 = vunpack.c.h.b16 %v249
    %v533 = vunpack.c.l.b16 %v250
    %v534 = vunpack.c.h.b16 %v250
    %v535 = vunpack.c.l.b16 %v251
    %v536 = vunpack.c.h.b16 %v251
    %v537 = vunpack.c.l.b16 %v252
    %v538 = vunpack.c.h.b16 %v252
    %v539 = vunpack.c.l.b16 %v253
    %v540 = vunpack.c.h.b16 %v253
    %v541 = vunpack.c.l.b16 %v254
    %v542 = vunpack.c.h.b16 %v254
    %v543 = vunpack.c.l.b16 %v255
    %v544 = vunpack.c.h.b16 %v255
    %v545 = vunpack.c.l.b16 %v256
    %v546 = vunpack.c.h.b16 %v256
    %v547 = vunpack.c.l.b16 %v257
    %v548 = vunpack.c.h.b16 %v257
    %v549 = vunpack.c.l.b16 %v258
    %v550 = vunpack.c.h.b16 %v258
    %v551 = vunpack.c.l.b16 %v259
    %v552 = vunpack.c.h.b16 %v259
    %v553 = vunpack.c.l.b16 %v260
    %v554 = vunpack.c.h.b16 %v260
    %v555 = vunpack.c.l.b16 %v261
    %v556 = vunpack.c.h.b16 %v261
    %v557 = vunpack.c.l.b16 %v262
    %v558 = vunpack.c.h.b16 %v262
    %v559 = vunpack.c.l.b16 %v263
    %v560 = vunpack.c.h.b16 %v263
    %v561 = vunpack.c.l.b16 %v264
    %v562 = vunpack.c.h.b16 %v264
    %v563 = vunpack.c.l.b16 %v265
    %v564 = vunpack.c.h.b16 %v265
    %v565 = vunpack.c.l.b16 %v266
    %v566 = vunpack.c.h.b16 %v266
    %v567 = vunpack.c.l.b16 %v267
    %v568 = vunpack.c.h.b16 %v267
    %v569 = vunpack.c.l.b16 %v268
    %v570 = vunpack.c.h.b16 %v268
    %v571 = vunpack.c.l.b16 %v269
    %v572 = vunpack.c.h.b16 %v269
    %v573 = vunpack.c.l.b16 %v270
    %v574 = vunpack.c.h.b16 %v270
    %v575 = vunpack.c.l.b16 %v271
    %v576 = vunpack.c.h.b16 %v271
    %v577 = vunpack.c.l.b16 %v272
    %v578 = vunpack.c.h.b16 %v272
    %v579 = vunpack.c.l.b16 %v273
    %v580 = vunpack.c.h.b16 %v273
    %v581 = vunpack.c.l.b16 %v274
    %v582 = vunpack.c.h.b16 %v274
    %v583 = vunpack.c.l.b16 %v275
    %v584 = vunpack.c.h.b16 %v275
    %v585 = vunpack.c.l.b16 %v276
    %v586 = vunpack.c.h.b16 %v276
    %v587 = vunpack.c.l.b16 %v277
    %v588 = vunpack.c.h.b16 %v277
    %v589 = vunpack.c.l.b16 %v278
    %v590 = vunpack.c.h.b16 %v278
    %v591 = vunpack.c.l.b16 %v279
    %v592 = vunpack.c.h.b16 %v279
    %v593 = vunpack.c.l.b16 %v280
    %v594 = vunpack.c.h.b16 %v280
    %v595 = vunpack.c.l.b16 %v281
    %v596 = vunpack.c.h.b16 %v281
    %v597 = vunpack.c.l.b16 %v282
    %v598 = vunpack.c.h.b16 %v282
    %v599 = vunpack.c.l.b16 %v283
    %v600 = vunpack.c.h.b16 %v283
    %v601 = vunpack.c.l.b16 %v284
    %v602 = vunpack.c.h.b16 %v284
    %v603 = vunpack.c.l.b16 %v285
    %v604 = vunpack.c.h.b16 %v285
    %v605 = vunpack.c.l.b16 %v286
    %v606 = vunpack.c.h.b16 %v286
    %v607 = vunpack.c.l.b16 %v287
    %v608 = vunpack.c.h.b16 %v287
    %v609 = vunpack.c.l.b16 %v288
    %v610 = vunpack.c.h.b16 %v288
    %v611 = vunpack.c.l.b16 %v289
    %v612 = vunpack.c.h.b16 %v289
    %v613 = vunpack.c.l.b16 %v290
    %v614 = vunpack.c.h.b16 %v290
    %v615 = vunpack.c.l.b16 %v291
    %v616 = vunpack.c.h.b16 %v291
    %v617 = vunpack.c.l.b16 %v292
    %v618 = vunpack.c.h.b16 %v292
    %v619 = vunpack.c.l.b16 %v293
    %v620 = vunpack.c.h.b16 %v293
    %v621 = vunpack.c.l.b16 %v294
    %v622 = vunpack.c.h.b16 %v294
    %v623 = vunpack.c.l.b16 %v295
    %v624 = vunpack.c.h.b16 %v295
    %v625 = vunpack.c.l.b16 %v296
    %v626 = vunpack.c.h.b16 %v296
    %v627 = vunpack.c.l.b16 %v297
    %v628 = vunpack.c.h.b16 %v297
    %v629 = vunpack.c.l.b16 %v298
    %v630 = vunpack.c.h.b16 %v298
    %v631 = vunpack.c.l.b16 %v299
    %v632 = vunpack.c.h.b16 %v299
    %v633 = vunpack.c.l.b16 %v300
    %v634 = vunpack.c.h.b16 %v300
    %v635 = vunpack.c.l.b16 %v301
    %v636 = vunpack.c.h.b16 %v301
    %v637 = vunpack.c.l.b16 %v302
    %v638 = vunpack.c.h.b16 %v302
    %v639 = vunpack.c.l.b16 %v303
    %v640 = vunpack.c.h.b16 %v303
    %v641 = vunpack.c.l.b16 %v304
    %v642 = vunpack.c.h.b16 %v304
    %v643 = vunpack.c.l.b16 %v305
    %v644 = vunpack.c.h.b16 %v305
    %v645 = vunpack.c.l.b16 %v306
    %v646 = vunpack.c.h.b16 %v306
    %v647 = vunpack.c.l.b16 %v307
    %v648 = vunpack.c.h.b16 %v307
    %v649 = vunpack.c.l.b16 %v308
    %v650 = vunpack.c.h.b16 %v308
    %v651 = vunpack.c.l.b16 %v309
    %v652 = vunpack.c.h.b16 %v309
    %v653 = vunpack.c.l.b16 %v310
    %v654 = vunpack.c.h.b16 %v310
    %v655 = vunpack.c.l.b16 %v311
    %v656 = vunpack.c.h.b16 %v311
    %v657 = vunpack.c.l.b16 %v312
    %v658 = vunpack.c.h.b16 %v312
    %v659 = vunpack.c.l.b16 %v313
    %v660 = vunpack.c.h.b16 %v313
    %v661 = vunpack.c.l.b16 %v314
    %v662 = vunpack.c.h.b16 %v314
    %v663 = vunpack.c.l.b16 %v315
    %v664 = vunpack.c.h.b16 %v315
    %v665 = vunpack.c.l.b16 %v316
    %v666 = vunpack.c.h.b16 %v316
    %v667 = vunpack.c.l.b16 %v317
    %v668 = vunpack.c.h.b16 %v317
    %v669 = vunpack.c.l.b16 %v318
    %v670 = vunpack.c.h.b16 %v318
    %v671 = vunpack.c.l.b16 %v319
    %v672 = vunpack.c.h.b16 %v319
    %v673 = vunpack.c.l.b16 %v320
    %v674 = vunpack.c.h.b16 %v320
    %v675 = vunpack.c.l.b16 %v321
    %v676 = vunpack.c.h.b16 %v321
    %v677 = vunpack.c.l.b16 %v322
    %v678 = vunpack.c.h.b16 %v322
    %v679 = vunpack.c.l.b16 %v323
    %v680 = vunpack.c.h.b16 %v323
    %v681 = vunpack.c.l.b16 %v324
    %v682 = vunpack.c.h.b16 %v324
    %v683 = vunpack.c.l.b16 %v325
    %v684 = vunpack.c.h.b16 %v325
    %v685 = vunpack.c.l.b16 %v326
    %v686 = vunpack.c.h.b16 %v326
    %v687 = vunpack.c.l.b16 %v327
    %v688 = vunpack.c.h.b16 %v327
    %v689 = vunpack.c.l.b16 %v328
    %v690 = vunpack.c.h.b16 %v328
    %v691 = vunpack.c.l.b16 %v329
    %v692 = vunpack.c.h.b16 %v329
    %v693 = vunpack.c.l.b16 %v330
    %v694 = vunpack.c.h.b16 %v330
    %v695 = vunpack.c.l.b16 %v331
    %v696 = vunpack.c.h.b16 %v331
    %v697 = vunpack.c.l.b16 %v332
    %v698 = vunpack.c.h.b16 %v332
    %v699 = vunpack.c.l.b16 %v333
    %v700 = vunpack.c.h.b16 %v333
    %v701 = vunpack.c.l.b16 %v334
    %v702 = vunpack.c.h.b16 %v334
    %v703 = vunpack.c.l.b16 %v335
    %v704 = vunpack.c.h.b16 %v335
    %v705 = vunpack.c.l.b16 %v336
    %v706 = vunpack.c.h.b16 %v336
    %v707 = vunpack.c.l.b16 %v337
    %v708 = vunpack.c.h.b16 %v337
    %v709 = vunpack.c.l.b16 %v338
    %v710 = vunpack.c.h.b16 %v338
    %v711 = vunpack.c.l.b16 %v339
    %v712 = vunpack.c.h.b16 %v339
    %v713 = vunpack.c.l.b16 %v340
    %v714 = vunpack.c.h.b16 %v340
    %v715 = vunpack.c.l.b16 %v341
    %v716 = vunpack.c.h.b16 %v341
    %v717 = vunpack.c.l.b16 %v342
    %v718 = vunpack.c.h.b16 %v342
    %v719 = vunpack.c.l.b16 %v343
    %v720 = vunpack.c.h.b16 %v343
    %v721 = vunpack.c.l.b16 %v344
    %v722 = vunpack.c.h.b16 %v344
    %v723 = vunpack.c.l.b16 %v345
    %v724 = vunpack.c.h.b16 %v345
    %v725 = vunpack.c.l.b16 %v346
    %v726 = vunpack.c.h.b16 %v346
    %v727 = vunpack.c.l.b16 %v347
    %v728 = vunpack.c.h.b16 %v347
    %v729 = vunpack.c.l.b16 %v348
    %v730 = vunpack.c.h.b16 %v348
    %v731 = vunpack.c.l.b16 %v349
    %v732 = vunpack.c.h.b16 %v349
    %v733 = vunpack.c.l.b16 %v350
    %v734 = vunpack.c.h.b16 %v350
    %v735 = vunpack.c.l.b16 %v351
    %v736 = vunpack.c.h.b16 %v351
    %v737 = vunpack.c.l.b16 %v352
    %v738 = vunpack.c.h.b16 %v352
    %v739 = vunpack.c.l.b16 %v353
    %v740 = vunpack.c.h.b16 %v353
    %v741 = vunpack.c.l.b16 %v354
    %v742 = vunpack.c.h.b16 %v354
    %v743 = vunpack.c.l.b16 %v355
    %v744 = vunpack.c.h.b16 %v355
    %v745 = vunpack.c.l.b16 %v356
    %v746 = vunpack.c.h.b16 %v356
    %v747 = vunpack.c.l.b16 %v357
    %v748 = vunpack.c.h.b16 %v357
    %v749 = vunpack.c.l.b16 %v358
    %v750 = vunpack.c.h.b16 %v358
    %v751 = vunpack.c.l.b16 %v359
    %v752 = vunpack.c.h.b16 %v359
    %v753 = vunpack.c.l.b16 %v360
    %v754 = vunpack.c.h.b16 %v360
    %v755 = vpack.c.b16 %v503, %v499
    %v756 = vpack.c.b16 %v504, %v500
    %v757 = vpack.c.b16 %v505, %v501
    %v758 = vpack.c.b16 %v506, %v502
    %v759 = vpack.c.b16 %v511, %v507
    %v760 = vpack.c.b16 %v512, %v508
    %v761 = vpack.c.b16 %v513, %v509
    %v762 = vpack.c.b16 %v514, %v510
    %v763 = vpack.c.b16 %v519, %v515
    %v764 = vpack.c.b16 %v520, %v516
    %v765 = vpack.c.b16 %v521, %v517
    %v766 = vpack.c.b16 %v522, %v518
    %v767 = vpack.c.b16 %v527, %v523
    %v768 = vpack.c.b16 %v528, %v524
    %v769 = vpack.c.b16 %v529, %v525
    %v770 = vpack.c.b16 %v530, %v526
    %v771 = vpack.c.b16 %v535, %v531
    %v772 = vpack.c.b16 %v536, %v532
    %v773 = vpack.c.b16 %v537, %v533
    %v774 = vpack.c.b16 %v538, %v534
    %v775 = vpack.c.b16 %v543, %v539
    %v776 = vpack.c.b16 %v544, %v540
    %v777 = vpack.c.b16 %v545, %v541
    %v778 = vpack.c.b16 %v546, %v542
    %v779 = vpack.c.b16 %v551, %v547
    %v780 = vpack.c.b16 %v552, %v548
    %v781 = vpack.c.b16 %v553, %v549
    %v782 = vpack.c.b16 %v554, %v550
    %v783 = vpack.c.b16 %v559, %v555
    %v784 = vpack.c.b16 %v560, %v556
    %v785 = vpack.c.b16 %v561, %v557
    %v786 = vpack.c.b16 %v562, %v558
    %v787 = vpack.c.b16 %v567, %v563
    %v788 = vpack.c.b16 %v568, %v564
    %v789 = vpack.c.b16 %v569, %v565
    %v790 = vpack.c.b16 %v570, %v566
    %v791 = vpack.c.b16 %v575, %v571
    %v792 = vpack.c.b16 %v576, %v572
    %v793 = vpack.c.b16 %v577, %v573
    %v794 = vpack.c.b16 %v578, %v574
    %v795 = vpack.c.b16 %v583, %v579
    %v796 = vpack.c.b16 %v584, %v580
    %v797 = vpack.c.b16 %v585, %v581
    %v798 = vpack.c.b16 %v586, %v582
    %v799 = vpack.c.b16 %v591, %v587
    %v800 = vpack.c.b16 %v592, %v588
    %v801 = vpack.c.b16 %v593, %v589
    %v802 = vpack.c.b16 %v594, %v590
    %v803 = vpack.c.b16 %v599, %v595
    %v804 = vpack.c.b16 %v600, %v596
    %v805 = vpack.c.b16 %v601, %v597
    %v806 = vpack.c.b16 %v602, %v598
    %v807 = vpack.c.b16 %v607, %v603
    %v808 = vpack.c.b16 %v608, %v604
    %v809 = vpack.c.b16 %v609, %v605
    %v810 = vpack.c.b16 %v610, %v606
    %v811 = vpack.c.b16 %v615, %v611
    %v812 = vpack.c.b16 %v616, %v612
    %v813 = vpack.c.b16 %v617, %v613
    %v814 = vpack.c.b16 %v618, %v614
    %v815 = vpack.c.b16 %v623, %v619
    %v816 = vpack.c.b16 %v624, %v620
    %v817 = vpack.c.b16 %v625, %v621
    %v818 = vpack.c.b16 %v626, %v622
    %v819 = vpack.c.b16 %v631, %v627
    %v820 = vpack.c.b16 %v632, %v628
    %v821 = vpack.c.b16 %v633, %v629
    %v822 = vpack.c.b16 %v634, %v630
    %v823 = vpack.c.b16 %v639, %v635
    %v824 = vpack.c.b16 %v640, %v636
    %v825 = vpack.c.b16 %v641, %v637
    %v826 = vpack.c.b16 %v642, %v638
    %v827 = vpack.c.b16 %v647, %v643
    %v828 = vpack.c.b16 %v648, %v644
    %v829 = vpack.c.b16 %v649, %v645
    %v830 = vpack.c.b16 %v650, %v646
    %v831 = vpack.c.b16 %v655, %v651
    %v832 = vpack.c.b16 %v656, %v652
    %v833 = vpack.c.b16 %v657, %v653
    %v834 = vpack.c.b16 %v658, %v654
    %v835 = vpack.c.b16 %v663, %v659
    %v836 = vpack.c.b16 %v664, %v660
    %v837 = vpack.c.b16 %v665, %v661
    %v838 = vpack.c.b16 %v666, %v662
    %v839 = vpack.c.b16 %v671, %v667
    %v840 = vpack.c.b16 %v672, %v668
    %v841 = vpack.c.b16 %v673, %v669
    %v842 = vpack.c.b16 %v674, %v670
    %v843 = vpack.c.b16 %v679, %v675
    %v844 = vpack.c.b16 %v680, %v676
    %v845 = vpack.c.b16 %v681, %v677
    %v846 = vpack.c.b16 %v682, %v678
    %v847 = vpack.c.b16 %v687, %v683
    %v848 = vpack.c.b16 %v688, %v684
    %v849 = vpack.c.b16 %v689, %v685
    %v850 = vpack.c.b16 %v690, %v686
    %v851 = vpack.c.b16 %v695, %v691
    %v852 = vpack.c.b16 %v696, %v692
    %v853 = vpack.c.b16 %v697, %v693
    %v854 = vpack.c.b16 %v698, %v694
    %v855 = vpack.c.b16 %v703, %v699
    %v856 = vpack.c.b16 %v704, %v700
    %v857 = vpack.c.b16 %v705, %v701
    %v858 = vpack.c.b16 %v706, %v702
    %v859 = vpack.c.b16 %v711, %v707
    %v860 = vpack.c.b16 %v712, %v708
    %v861 = vpack.c.b16 %v713, %v709
    %v862 = vpack.c.b16 %v714, %v710
    %v863 = vpack.c.b16 %v719, %v715
    %v864 = vpack.c.b16 %v720, %v716
    %v865 = vpack.c.b16 %v721, %v717
    %v866 = vpack.c.b16 %v722, %v718
    %v867 = vpack.c.b16 %v727, %v723
    %v868 = vpack.c.b16 %v728, %v724
    %v869 = vpack.c.b16 %v729, %v725
    %v870 = vpack.c.b16 %v730, %v726
    %v871 = vpack.c.b16 %v735, %v731
    %v872 = vpack.c.b16 %v736, %v732
    %v873 = vpack.c.b16 %v737, %v733
    %v874 = vpack.c.b16 %v738, %v734
    %v875 = vpack.c.b16 %v743, %v739
    %v876 = vpack.c.b16 %v744, %v740
    %v877 = vpack.c.b16 %v745, %v741
    %v878 = vpack.c.b16 %v746, %v742
    %v879 = vpack.c.b16 %v751, %v747
    %v880 = vpack.c.b16 %v752, %v748
    %v881 = vpack.c.b16 %v753, %v749
    %v882 = vpack.c.b16 %v754, %v750
    %1011 = vmatpush.bf16.msra.mxu0 %v783
    %1012 = vmatpush.bf16.msra.mxu0 %v779
    %1013 = vmatpush.bf16.msra.mxu0 %v775
    %1014 = vmatpush.bf16.msra.mxu0 %v771
    %1015 = vmatpush.bf16.msra.mxu0 %v767
    %1016 = vmatpush.bf16.msra.mxu0 %v763
    %1017 = vmatpush.bf16.msra.mxu0 %v759
    %1018 = vmatpush.bf16.msra.mxu0 %v755
    %1019 = vmatmul.bf16.gmra.mxu0 %v229
    %v1020 = vpop.f32.mrf.mxu0
    %v1021 = vadd.f32 %v363, %v1020
    %v1022 = vpop.f32.mrf.mxu0
    %1023 = vdwg.mxu0
    %1024 = vmatpush.bf16.msra.mxu0 %v815
    %1025 = vmatpush.bf16.msra.mxu0 %v811
    %1026 = vmatpush.bf16.msra.mxu0 %v807
    %1027 = vmatpush.bf16.msra.mxu0 %v803
    %1028 = vmatpush.bf16.msra.mxu0 %v799
    %1029 = vmatpush.bf16.msra.mxu0 %v795
    %1030 = vmatpush.bf16.msra.mxu0 %v791
    %1031 = vmatpush.bf16.msra.mxu0 %v787
    %1032 = vmatmul.bf16.gmra.mxu0 %v230
    %v1033 = vpop.f32.mrf.mxu0
    %v1034 = vadd.f32 %v1021, %v1033
    %v1035 = vpop.f32.mrf.mxu0
    %1036 = vdwg.mxu0
    %1037 = vmatpush.bf16.msra.mxu0 %v847
    %1038 = vmatpush.bf16.msra.mxu0 %v843
    %1039 = vmatpush.bf16.msra.mxu0 %v839
    %1040 = vmatpush.bf16.msra.mxu0 %v835
    %1041 = vmatpush.bf16.msra.mxu0 %v831
    %1042 = vmatpush.bf16.msra.mxu0 %v827
    %1043 = vmatpush.bf16.msra.mxu0 %v823
    %1044 = vmatpush.bf16.msra.mxu0 %v819
    %1045 = vmatmul.bf16.gmra.mxu0 %v231
    %v1046 = vpop.f32.mrf.mxu0
    %v1047 = vadd.f32 %v1034, %v1046
    %v1048 = vpop.f32.mrf.mxu0
    %1049 = vdwg.mxu0
    %1050 = vmatpush.bf16.msra.mxu0 %v879
    %1051 = vmatpush.bf16.msra.mxu0 %v875
    %1052 = vmatpush.bf16.msra.mxu0 %v871
    %1053 = vmatpush.bf16.msra.mxu0 %v867
    %1054 = vmatpush.bf16.msra.mxu0 %v863
    %1055 = vmatpush.bf16.msra.mxu0 %v859
    %1056 = vmatpush.bf16.msra.mxu0 %v855
    %1057 = vmatpush.bf16.msra.mxu0 %v851
    %1058 = vmatmul.bf16.gmra.mxu0 %v232
    %v1059 = vpop.f32.mrf.mxu0
    %v1060 = vadd.f32 %v1047, %v1059
    %v1061 = vpop.f32.mrf.mxu0
    %1062 = vdwg.mxu0
    %1063 = vmatpush.bf16.msra.mxu0 %v784
    %1064 = vmatpush.bf16.msra.mxu0 %v780
    %1065 = vmatpush.bf16.msra.mxu0 %v776
    %1066 = vmatpush.bf16.msra.mxu0 %v772
    %1067 = vmatpush.bf16.msra.mxu0 %v768
    %1068 = vmatpush.bf16.msra.mxu0 %v764
    %1069 = vmatpush.bf16.msra.mxu0 %v760
    %1070 = vmatpush.bf16.msra.mxu0 %v756
    %1071 = vmatmul.bf16.gmra.mxu0 %v229
    %v1072 = vpop.f32.mrf.mxu0
    %v1073 = vadd.f32 %v364, %v1072
    %v1074 = vpop.f32.mrf.mxu0
    %1075 = vdwg.mxu0
    %1076 = vmatpush.bf16.msra.mxu0 %v816
    %1077 = vmatpush.bf16.msra.mxu0 %v812
    %1078 = vmatpush.bf16.msra.mxu0 %v808
    %1079 = vmatpush.bf16.msra.mxu0 %v804
    %1080 = vmatpush.bf16.msra.mxu0 %v800
    %1081 = vmatpush.bf16.msra.mxu0 %v796
    %1082 = vmatpush.bf16.msra.mxu0 %v792
    %1083 = vmatpush.bf16.msra.mxu0 %v788
    %1084 = vmatmul.bf16.gmra.mxu0 %v230
    %v1085 = vpop.f32.mrf.mxu0
    %v1086 = vadd.f32 %v1073, %v1085
    %v1087 = vpop.f32.mrf.mxu0
    %1088 = vdwg.mxu0
    %1089 = vmatpush.bf16.msra.mxu0 %v848
    %1090 = vmatpush.bf16.msra.mxu0 %v844
    %1091 = vmatpush.bf16.msra.mxu0 %v840
    %1092 = vmatpush.bf16.msra.mxu0 %v836
    %1093 = vmatpush.bf16.msra.mxu0 %v832
    %1094 = vmatpush.bf16.msra.mxu0 %v828
    %1095 = vmatpush.bf16.msra.mxu0 %v824
    %1096 = vmatpush.bf16.msra.mxu0 %v820
    %1097 = vmatmul.bf16.gmra.mxu0 %v231
    %v1098 = vpop.f32.mrf.mxu0
    %v1099 = vadd.f32 %v1086, %v1098
    %v1100 = vpop.f32.mrf.mxu0
    %1101 = vdwg.mxu0
    %1102 = vmatpush.bf16.msra.mxu0 %v880
    %1103 = vmatpush.bf16.msra.mxu0 %v876
    %1104 = vmatpush.bf16.msra.mxu0 %v872
    %1105 = vmatpush.bf16.msra.mxu0 %v868
    %1106 = vmatpush.bf16.msra.mxu0 %v864
    %1107 = vmatpush.bf16.msra.mxu0 %v860
    %1108 = vmatpush.bf16.msra.mxu0 %v856
    %1109 = vmatpush.bf16.msra.mxu0 %v852
    %1110 = vmatmul.bf16.gmra.mxu0 %v232
    %v1111 = vpop.f32.mrf.mxu0
    %v1112 = vadd.f32 %v1099, %v1111
    %v1113 = vpop.f32.mrf.mxu0
    %1114 = vdwg.mxu0
    %1115 = vmatpush.bf16.msra.mxu0 %v785
    %1116 = vmatpush.bf16.msra.mxu0 %v781
    %1117 = vmatpush.bf16.msra.mxu0 %v777
    %1118 = vmatpush.bf16.msra.mxu0 %v773
    %1119 = vmatpush.bf16.msra.mxu0 %v769
    %1120 = vmatpush.bf16.msra.mxu0 %v765
    %1121 = vmatpush.bf16.msra.mxu0 %v761
    %1122 = vmatpush.bf16.msra.mxu0 %v757
    %1123 = vmatmul.bf16.gmra.mxu0 %v229
    %v1124 = vpop.f32.mrf.mxu0
    %v1125 = vadd.f32 %v365, %v1124
    %v1126 = vpop.f32.mrf.mxu0
    %1127 = vdwg.mxu0
    %1128 = vmatpush.bf16.msra.mxu0 %v817
    %1129 = vmatpush.bf16.msra.mxu0 %v813
    %1130 = vmatpush.bf16.msra.mxu0 %v809
    %1131 = vmatpush.bf16.msra.mxu0 %v805
    %1132 = vmatpush.bf16.msra.mxu0 %v801
    %1133 = vmatpush.bf16.msra.mxu0 %v797
    %1134 = vmatpush.bf16.msra.mxu0 %v793
    %1135 = vmatpush.bf16.msra.mxu0 %v789
    %1136 = vmatmul.bf16.gmra.mxu0 %v230
    %v1137 = vpop.f32.mrf.mxu0
    %v1138 = vadd.f32 %v1125, %v1137
    %v1139 = vpop.f32.mrf.mxu0
    %1140 = vdwg.mxu0
    %1141 = vmatpush.bf16.msra.mxu0 %v849
    %1142 = vmatpush.bf16.msra.mxu0 %v845
    %1143 = vmatpush.bf16.msra.mxu0 %v841
    %1144 = vmatpush.bf16.msra.mxu0 %v837
    %1145 = vmatpush.bf16.msra.mxu0 %v833
    %1146 = vmatpush.bf16.msra.mxu0 %v829
    %1147 = vmatpush.bf16.msra.mxu0 %v825
    %1148 = vmatpush.bf16.msra.mxu0 %v821
    %1149 = vmatmul.bf16.gmra.mxu0 %v231
    %v1150 = vpop.f32.mrf.mxu0
    %v1151 = vadd.f32 %v1138, %v1150
    %v1152 = vpop.f32.mrf.mxu0
    %1153 = vdwg.mxu0
    %1154 = vmatpush.bf16.msra.mxu0 %v881
    %1155 = vmatpush.bf16.msra.mxu0 %v877
    %1156 = vmatpush.bf16.msra.mxu0 %v873
    %1157 = vmatpush.bf16.msra.mxu0 %v869
    %1158 = vmatpush.bf16.msra.mxu0 %v865
    %1159 = vmatpush.bf16.msra.mxu0 %v861
    %1160 = vmatpush.bf16.msra.mxu0 %v857
    %1161 = vmatpush.bf16.msra.mxu0 %v853
    %1162 = vmatmul.bf16.gmra.mxu0 %v232
    %v1163 = vpop.f32.mrf.mxu0
    %v1164 = vadd.f32 %v1151, %v1163
    %v1165 = vpop.f32.mrf.mxu0
    %1166 = vdwg.mxu0
    %1167 = vmatpush.bf16.msra.mxu0 %v786
    %1168 = vmatpush.bf16.msra.mxu0 %v782
    %1169 = vmatpush.bf16.msra.mxu0 %v778
    %1170 = vmatpush.bf16.msra.mxu0 %v774
    %1171 = vmatpush.bf16.msra.mxu0 %v770
    %1172 = vmatpush.bf16.msra.mxu0 %v766
    %1173 = vmatpush.bf16.msra.mxu0 %v762
    %1174 = vmatpush.bf16.msra.mxu0 %v758
    %1175 = vmatmul.bf16.gmra.mxu0 %v229
    %v1176 = vpop.f32.mrf.mxu0
    %v1177 = vadd.f32 %v366, %v1176
    %v1178 = vpop.f32.mrf.mxu0
    %1179 = vdwg.mxu0
    %1180 = vmatpush.bf16.msra.mxu0 %v818
    %1181 = vmatpush.bf16.msra.mxu0 %v814
    %1182 = vmatpush.bf16.msra.mxu0 %v810
    %1183 = vmatpush.bf16.msra.mxu0 %v806
    %1184 = vmatpush.bf16.msra.mxu0 %v802
    %1185 = vmatpush.bf16.msra.mxu0 %v798
    %1186 = vmatpush.bf16.msra.mxu0 %v794
    %1187 = vmatpush.bf16.msra.mxu0 %v790
    %1188 = vmatmul.bf16.gmra.mxu0 %v230
    %v1189 = vpop.f32.mrf.mxu0
    %v1190 = vadd.f32 %v1177, %v1189
    %v1191 = vpop.f32.mrf.mxu0
    %1192 = vdwg.mxu0
    %1193 = vmatpush.bf16.msra.mxu0 %v850
    %1194 = vmatpush.bf16.msra.mxu0 %v846
    %1195 = vmatpush.bf16.msra.mxu0 %v842
    %1196 = vmatpush.bf16.msra.mxu0 %v838
    %1197 = vmatpush.bf16.msra.mxu0 %v834
    %1198 = vmatpush.bf16.msra.mxu0 %v830
    %1199 = vmatpush.bf16.msra.mxu0 %v826
    %1200 = vmatpush.bf16.msra.mxu0 %v822
    %1201 = vmatmul.bf16.gmra.mxu0 %v231
    %v1202 = vpop.f32.mrf.mxu0
    %v1203 = vadd.f32 %v1190, %v1202
    %v1204 = vpop.f32.mrf.mxu0
    %1205 = vdwg.mxu0
    %1206 = vmatpush.bf16.msra.mxu0 %v882
    %1207 = vmatpush.bf16.msra.mxu0 %v878
    %1208 = vmatpush.bf16.msra.mxu0 %v874
    %1209 = vmatpush.bf16.msra.mxu0 %v870
    %1210 = vmatpush.bf16.msra.mxu0 %v866
    %1211 = vmatpush.bf16.msra.mxu0 %v862
    %1212 = vmatpush.bf16.msra.mxu0 %v858
    %1213 = vmatpush.bf16.msra.mxu0 %v854
    %1214 = vmatmul.bf16.gmra.mxu0 %v232
    %v1215 = vpop.f32.mrf.mxu0
    %v1216 = vadd.f32 %v1203, %v1215
    %v1217 = vpop.f32.mrf.mxu0
    %1218 = vdwg.mxu0
    %v1219 = vmax.f32 %v1060, 0.0
    %v1220 = vmax.f32 %v1112, 0.0
    %v1221 = vmax.f32 %v1164, 0.0
    %v1222 = vmax.f32 %v1216, 0.0
    %v1223 = vld [vmem:[#allocation11] sm:$0xf]
    %v1225 = vperm.slane %v1223, 0
    %v1226 = vperm.slane %v1223, 1
    %v1227 = vperm.slane %v1223, 2
    %v1228 = vperm.slane %v1223, 3
    %v1233 = vmul.f32 %v1219, %v1225
    %v1234 = vmul.f32 %v1220, %v1226
    %v1235 = vmul.f32 %v1221, %v1227
    %v1236 = vmul.f32 %v1222, %v1228
    %v1237 = vadd.f32 %v1233, %v1234
    %v1238 = vadd.f32 %v1237, %v1235
    %v1239 = vadd.f32 %v1238, %v1236
    %1240 = vadd.xlane.f32.xlu0 %v1239
    %v1241 = vpop.xlane.xlu0 %1240
    %v1242 = vld [vmem:[#allocation2] sm:$0x1]
    %v1244 = vperm.slane %v1242, 0
    %v1246 = vadd.f32 %v1241, %v1244
    %1248 = vset.pattern.permute.xlu0 0
    %1249 = vperm.xlu0 %1248, %v1246
    %v1250 = vpop.permute.xlu0 %1249
    %v1251 = vlaneseq
    %v1252 = vand.u32 %v1251, 127
    %v1253 = vperm.slane %v1250, %v1252
    %vm1255 = vcmask 57344
    %1256 = vst.msk [vmem:[#allocation12] sm:$0x1] %vm1255, %v1253
    // Predicated region
    $region58: #{tpu_custom_call.1} parent=1 // pred_check
      _
    $region59: #{tpu_custom_call.1} parent=1 // pred_check_branch
      %1258 = sbr.rel (0) target = $region61
    $region60: #{tpu_custom_call.1} parent=1 // pred_region
      %1260 = vsyncadd [#allocation5], 0
      %s1262 = sshll.u32 [#allocation12], 4
      %s1263 = int_to_ptr.vmem [resolvable:$true] %s1262
      %s1264 = sshll.u32 %s9, 4
      %s1265 = int_to_ptr.hbm [resolvable:$true] %s1264
      %1267 = dma.vmem_to_hbm [thread:$0]  %s1263, 16, %s1265, [#allocation5]
    $region61: #{tpu_custom_call.1} parent=1 // pred_fallthru
      _
    // Predicated region
    $region62: #{tpu_custom_call.1} parent=1 // pred_check
      _
    $region63: #{tpu_custom_call.1} parent=1 // pred_check_branch
      %1269 = sbr.rel (0) target = $region65
    $region64: #{tpu_custom_call.1} parent=1 // pred_region
      %1271 = dma.done [#allocation5], 16
    $region65: #{tpu_custom_call.1} parent=1 // pred_fallthru
      _
    %1272 = vsyncpa [#allocation4], 1
    %1273 = vsyncpa [#allocation7], 1
    %1274 = vsyncpa [#allocation10], 1
    %1275 = vsyncpa [#allocation5], 1

</llo_original>
